<compile_context>
chip_gen: v7x
topology: tpu7x:2x2x1
jax: 0.10.0
libtpu: 0.0.40
codegen_flags: <defaults>
</compile_context>

<pallas_src>
import jax
import jax.numpy as jnp
from jax.experimental import pallas as pl
from jax.experimental.pallas import tpu as pltpu


def _round_up(x, m):
    return (x + m - 1) // m * m


# ------------------------------ Pallas kernel ------------------------------ #
def _matmul_bias_kernel(a_ref, w_ref, b_ref, o_ref, acc_ref):
    # a_ref: (tm, tk) bf16   w_ref: (tk, Np) bf16   b_ref: (1, Np) f32
    # o_ref: (tm, Np) f32    acc_ref: (tm, Np) f32 scratch, resident across K.
    @pl.when(pl.program_id(1) == 0)
    def _():
        acc_ref[...] = jnp.zeros_like(acc_ref)

    acc_ref[...] += jnp.dot(a_ref[...], w_ref[...],
                            preferred_element_type=jnp.float32)

    @pl.when(pl.program_id(1) == pl.num_programs(1) - 1)
    def _():
        o_ref[...] = (acc_ref[...] + b_ref[...]).astype(o_ref.dtype)


def _pallas_matmul_bias(a, w, b):
    """(M, K) @ (K, N) + (1, N) -> (M, N) float32, matmul on the MXU."""
    M, K = a.shape
    Kw, N = w.shape
    assert K == Kw and b.shape == (1, N)

    # ---- lane-dense N and 8-aligned K (zero padding is exact) ----
    Np = _round_up(N, 128)
    max_tk = 2048
    if _round_up(K, 8) <= max_tk:
        Kp = _round_up(K, 8)
        tk = Kp                               # single K step (full extent)
    else:                                     # tile the reduction axis
        tk = max_tk
        Kp = _round_up(K, tk)
    if Kp != K:
        a = jnp.pad(a, ((0, 0), (0, Kp - K)))
        w = jnp.pad(w, ((0, Kp - K), (0, 0)))
    if Np != N:
        w = jnp.pad(w, ((0, 0), (0, Np - N)))
        b = jnp.pad(b, ((0, 0), (0, Np - N)))

    # bf16 MXU operands (cast in the wrapper, not per-element in-kernel);
    # accumulation stays f32 inside the kernel.
    a = a.astype(jnp.bfloat16)
    w = w.astype(jnp.bfloat16)
    b = b.astype(jnp.float32)

    # ---- M tile: as large as the VMEM budget allows, but keep >= 2 grid
    # steps along the "parallel" axis when M permits (v7x has 2 TensorCores).
    def _blk_bytes(tm_):
        return (2 * tm_ * tk * 2          # A, double-buffered, bf16
                + 2 * tk * Np * 2         # W, double-buffered, bf16
                + 2 * tm_ * Np * 4        # out, double-buffered, f32
                + tm_ * Np * 4)           # accumulator scratch, f32

    budget = 24 * 1024 * 1024             # fits v7x's 64 MiB physical VMEM
    tm = 512
    while tm > 128 and _blk_bytes(tm) > budget:
        tm //= 2
    while tm > 128 and _round_up(M, tm) == tm:
        tm //= 2                          # keep >= 2 M tiles when M allows
    Mp = _round_up(M, tm)
    if Mp != M:
        a = jnp.pad(a, ((0, Mp - M), (0, 0)))

    out = pl.pallas_call(
        _matmul_bias_kernel,
        out_shape=jax.ShapeDtypeStruct((Mp, Np), jnp.float32),
        grid_spec=pltpu.PrefetchScalarGridSpec(
            num_scalar_prefetch=0,
            grid=(Mp // tm, Kp // tk),
            in_specs=[
                pl.BlockSpec((tm, tk), lambda i, k: (i, k)),   # A tile
                pl.BlockSpec((tk, Np), lambda i, k: (k, 0)),   # W K-slab
                pl.BlockSpec((1, Np), lambda i, k: (0, 0)),    # bias
            ],
            out_specs=pl.BlockSpec((tm, Np), lambda i, k: (i, 0)),
            scratch_shapes=[pltpu.VMEM((tm, Np), jnp.float32)]),
        compiler_params=pltpu.CompilerParams(
            dimension_semantics=("parallel", "arbitrary"),
            vmem_limit_bytes=48 * 1024 * 1024),
    )(a, w, b)
    return out[:M, :N]


# ------------------------------ conv via im2col ---------------------------- #
def _im2col(x_nhwc, kh, kw, ph, pw):
    B, H, W, C = x_nhwc.shape
    xp = jnp.pad(x_nhwc, ((0, 0), (ph, ph), (pw, pw), (0, 0)))
    cols = []
    for i in range(kh):
        for j in range(kw):
            cols.append(xp[:, i:i + H, j:j + W, :])
    a = jnp.concatenate(cols, axis=-1)                 # (B, H, W, KH*KW*C)
    return a.reshape(B * H * W, kh * kw * C)


def conv2d_group(x_nchw, heads, ksize, padding):
    """Run all stride-1 'same'-padded Conv2d heads that share (ksize, padding)
    as ONE fused Pallas matmul.  `heads` is a list of (name, weight, bias)
    with weight in PyTorch (Cout, Cin, KH, KW) layout.  Returns {name: NHWC}."""
    B, C, H, W = x_nchw.shape
    KH, KW = ksize
    ph, pw = padding
    x_nhwc = jnp.transpose(x_nchw, (0, 2, 3, 1))
    a = _im2col(x_nhwc, KH, KW, ph, pw)                       # (B*H*W, K)

    wms, bs, couts = [], [], []
    for _, wgt, bias in heads:
        cout = wgt.shape[0]
        wms.append(jnp.transpose(wgt, (2, 3, 1, 0)).reshape(KH * KW * C, cout))
        bs.append(bias)
        couts.append(cout)
    wm = jnp.concatenate(wms, axis=1)                         # (K, sum Cout)
    bias_all = jnp.concatenate(bs).reshape(1, -1)

    o = _pallas_matmul_bias(a, wm, bias_all)                  # (B*H*W, sumCout)

    outs, off = {}, 0
    for (name, _, _), cout in zip(heads, couts):
        outs[name] = o[:, off:off + cout].reshape(B, H, W, cout)
        off += cout
    return outs


# ------------------------------ APL module ---------------------------------- #
_LONG_KSIZE = {'feat2': 33, 'feat3': 29, 'feat4': 15, 'feat5': 15, 'feat6': 15}
_MED_IDX = {'feat1': 0, 'feat2': 1, 'feat3': 2, 'feat4': 3, 'feat5': 4, 'feat6': 5}
_LONG_IDX = {'feat2': 0, 'feat3': 1, 'feat4': 2, 'feat5': 3, 'feat6': 4}


class APL:
    def __init__(self, features_name, inplanes, key,
                 anchor_density_medium_list=(1, 2, 3, 4, 3, 2),
                 anchor_density_long_list=(4, 4, 6, 4, 3)):
        self.features_name = features_name
        self.inplanes = inplanes
        self.squre_density_num = 1
        self.medium_density_num = anchor_density_medium_list[_MED_IDX[features_name]]

        specs = {
            'square_conv_loc':      (8 * self.squre_density_num, (3, 5), (1, 2)),
            'square_conv_cla':      (1 * self.squre_density_num, (3, 5), (1, 2)),
            'medium_vertical_loc':  (32 * self.medium_density_num, (5, 3), (2, 1)),
            'medium_vertical_cla':  (4 * self.medium_density_num, (5, 3), (2, 1)),
            'medium_horizonal_loc': (32 * self.medium_density_num, (3, 5), (1, 2)),
            'medium_horizonal_cla': (4 * self.medium_density_num, (3, 5), (1, 2)),
        }
        # Fusion groups: heads that share (kernel size, padding) share one
        # im2col matrix and are computed by a single Pallas matmul.
        groups = [
            ((3, 5), (1, 2), ['square_conv_loc', 'square_conv_cla',
                              'medium_horizonal_loc', 'medium_horizonal_cla']),
            ((5, 3), (2, 1), ['medium_vertical_loc', 'medium_vertical_cla']),
        ]
        if features_name != 'feat1':
            self.long_density_num = anchor_density_long_list[_LONG_IDX[features_name]]
            ks = _LONG_KSIZE[features_name]
            pad = ks // 2
            specs['long_vertical_loc'] = (24 * self.long_density_num, (ks, 1), (pad, 0))
            specs['long_vertical_cla'] = (3 * self.long_density_num, (ks, 1), (pad, 0))
            specs['long_horizonal_loc'] = (24 * self.long_density_num, (1, ks), (0, pad))
            # long_horizonal_cla exists in the reference module but its forward
            # result is discarded (the reference appends long_vertical_cla
            # twice), so the parameter exists but the dead conv is skipped.
            specs['long_horizonal_cla'] = (3 * self.long_density_num, (1, ks), (0, pad))
            groups.append(((ks, 1), (pad, 0),
                           ['long_vertical_loc', 'long_vertical_cla']))
            groups.append(((1, ks), (0, pad), ['long_horizonal_loc']))
        self.specs = specs
        self.groups = groups

        # Deterministic synthetic parameter init (not matching torch's kaiming).
        self.params = {}
        keys = jax.random.split(key, len(specs))
        for (name, (cout, ksz, _)), k in zip(sorted(specs.items()), keys):
            kw_, kb_ = jax.random.split(k)
            w = 0.05 * jax.random.normal(kw_, (cout, inplanes, ksz[0], ksz[1]),
                                         jnp.float32)
            b = 0.01 * jax.random.normal(kb_, (cout,), jnp.float32)
            self.params[name] = (w, b)

    def __call__(self, x):
        B = x.shape[0]

        outs = {}
        for ksize, pad, head_names in self.groups:
            heads = [(n,) + self.params[n] for n in head_names]
            outs.update(conv2d_group(x, heads, ksize, pad))

        def view(name, k):
            return outs[name].reshape(B, -1, k)

        location = [view('square_conv_loc', 8),
                    view('medium_vertical_loc', 8),
                    view('medium_horizonal_loc', 8)]
        classify = [view('square_conv_cla', 1),
                    view('medium_vertical_cla', 1),
                    view('medium_horizonal_cla', 1)]
        if self.features_name != 'feat1':
            location.append(view('long_vertical_loc', 8))
            location.append(view('long_horizonal_loc', 8))
            long_vertical_cla = view('long_vertical_cla', 1)
            # NOTE: the reference appends long_vertical_cla a second time
            # (instead of long_horizonal_cla) — reproduced faithfully.
            classify.append(long_vertical_cla)
            classify.append(long_vertical_cla)
        fms_loc = jnp.concatenate(location, axis=1)
        fms_cla = jnp.concatenate(classify, axis=1)
        return fms_loc, fms_cla


# ------------------------------ demo ---------------------------------------- #
if __name__ == "__main__":
    key = jax.random.PRNGKey(0)
    k_params, k_x = jax.random.split(key)

    inplanes = 4
    model = APL('feat4', inplanes, k_params)

    # x: NCHW, matching PyTorch convention.
    x = jax.random.normal(k_x, (2, inplanes, 16, 16), jnp.float32)

    fwd = jax.jit(model.__call__)
    fms_loc, fms_cla = fwd(x)
    jax.block_until_ready((fms_loc, fms_cla))

    assert fms_loc.shape[0] == 2 and fms_loc.shape[2] == 8
    assert fms_cla.shape[0] == 2 and fms_cla.shape[2] == 1
    print("KERNEL_OK")
</pallas_src>

<mosaic_0001>
module attributes {stable_mosaic.version = 11 : i64} {
  func.func @_matmul_bias_kernel(%arg0: i32, %arg1: i32, %arg2: memref<256x64xbf16, #tpu.memory_space<vmem>>, %arg3: memref<64x256xbf16, #tpu.memory_space<vmem>>, %arg4: memref<1x256xf32, #tpu.memory_space<vmem>>, %arg5: memref<256x256xf32, #tpu.memory_space<vmem>>, %arg6: memref<256x256xf32, #tpu.memory_space<vmem>>) attributes {dimension_semantics = [#tpu.dimension_semantics<parallel>, #tpu.dimension_semantics<arbitrary>], iteration_bounds = array<i64: 2, 1>, scalar_prefetch = 0 : i64, scratch_operands = 1 : i64, tpu.core_type = #tpu.core_type<tc>, window_params = [{transform_indices = @transform_0, window_bounds = array<i64: 256, 64>}, {transform_indices = @transform_1, window_bounds = array<i64: 64, 256>}, {pipeline_mode = #tpu.pipeline_mode<synchronous>, transform_indices = @transform_2, window_bounds = array<i64: 1, 256>}, {transform_indices = @transform_3, window_bounds = array<i64: 256, 256>}]} {
    %c0_i32 = arith.constant 0 : i32
    %0 = arith.cmpi eq, %arg1, %c0_i32 : i32
    %1 = arith.extui %0 : i1 to i32
    %c0_i32_0 = arith.constant 0 : i32
    %2 = arith.cmpi ne, %1, %c0_i32_0 : i32
    scf.if %2 {
      %cst_10 = arith.constant 0.000000e+00 : f32
      %12 = vector.broadcast %cst_10 : f32 to vector<256x256xf32>
      %c0_11 = arith.constant 0 : index
      %c0_12 = arith.constant 0 : index
      %13 = vector.load %arg6[%c0_11, %c0_12] : memref<256x256xf32, #tpu.memory_space<vmem>>, vector<256x256xf32>
      tpu.vector_store %arg6[%c0_11, %c0_12], %12 {strides = array<i32>} : memref<256x256xf32, #tpu.memory_space<vmem>>, vector<256x256xf32>,
    } else {
    }
    %c0 = arith.constant 0 : index
    %c0_1 = arith.constant 0 : index
    %3 = vector.load %arg6[%c0, %c0_1] : memref<256x256xf32, #tpu.memory_space<vmem>>, vector<256x256xf32>
    %c0_2 = arith.constant 0 : index
    %c0_3 = arith.constant 0 : index
    %4 = vector.load %arg2[%c0_2, %c0_3] : memref<256x64xbf16, #tpu.memory_space<vmem>>, vector<256x64xbf16>
    %c0_4 = arith.constant 0 : index
    %c0_5 = arith.constant 0 : index
    %5 = vector.load %arg3[%c0_4, %c0_5] : memref<64x256xbf16, #tpu.memory_space<vmem>>, vector<64x256xbf16>
    %cst = arith.constant dense<0.000000e+00> : vector<256x256xf32>
    %6 = tpu.matmul %4, %5, %cst {dimension_numbers = #tpu.dot_dimension_numbers<[1], [0], [0], [1], [0, 0, 1, 1], [], []>} : vector<256x64xbf16>, vector<64x256xbf16>, vector<256x256xf32> -> vector<256x256xf32>
    %7 = arith.addf %3, %6 : vector<256x256xf32>
    %c0_6 = arith.constant 0 : index
    %c0_7 = arith.constant 0 : index
    %8 = vector.load %arg6[%c0_6, %c0_7] : memref<256x256xf32, #tpu.memory_space<vmem>>, vector<256x256xf32>
    tpu.vector_store %arg6[%c0_6, %c0_7], %7 {strides = array<i32>} : memref<256x256xf32, #tpu.memory_space<vmem>>, vector<256x256xf32>,
    %c0_i32_8 = arith.constant 0 : i32
    %9 = arith.cmpi eq, %arg1, %c0_i32_8 : i32
    %10 = arith.extui %9 : i1 to i32
    %c0_i32_9 = arith.constant 0 : i32
    %11 = arith.cmpi ne, %10, %c0_i32_9 : i32
    scf.if %11 {
      %c0_10 = arith.constant 0 : index
      %c0_11 = arith.constant 0 : index
      %12 = vector.load %arg6[%c0_10, %c0_11] : memref<256x256xf32, #tpu.memory_space<vmem>>, vector<256x256xf32>
      %c0_12 = arith.constant 0 : index
      %c0_13 = arith.constant 0 : index
      %13 = vector.load %arg4[%c0_12, %c0_13] : memref<1x256xf32, #tpu.memory_space<vmem>>, vector<1x256xf32>
      %14 = vector.broadcast %13 : vector<1x256xf32> to vector<256x256xf32>
      %15 = arith.addf %12, %14 : vector<256x256xf32>
      %c0_14 = arith.constant 0 : index
      %c0_15 = arith.constant 0 : index
      %16 = vector.load %arg5[%c0_14, %c0_15] : memref<256x256xf32, #tpu.memory_space<vmem>>, vector<256x256xf32>
      tpu.vector_store %arg5[%c0_14, %c0_15], %15 {strides = array<i32>} : memref<256x256xf32, #tpu.memory_space<vmem>>, vector<256x256xf32>,
    } else {
    }
    return
  }
  func.func @transform_0(%arg0: i32, %arg1: i32) -> (i32, i32) {
    %c0_i32 = arith.constant 0 : i32
    return %arg0, %arg1 : i32, i32
  }
  func.func @transform_1(%arg0: i32, %arg1: i32) -> (i32, i32) {
    %c0_i32 = arith.constant 0 : i32
    %c0_i32_0 = arith.constant 0 : i32
    return %arg1, %c0_i32 : i32, i32
  }
  func.func @transform_2(%arg0: i32, %arg1: i32) -> (i32, i32) {
    %c0_i32 = arith.constant 0 : i32
    %c0_i32_0 = arith.constant 0 : i32
    %c0_i32_1 = arith.constant 0 : i32
    return %c0_i32, %c0_i32_0 : i32, i32
  }
  func.func @transform_3(%arg0: i32, %arg1: i32) -> (i32, i32) {
    %c0_i32 = arith.constant 0 : i32
    %c0_i32_0 = arith.constant 0 : i32
    return %arg0, %c0_i32 : i32, i32
  }
}

</mosaic_0001>

<llo_original>
// kernel: a_call__.6
$region0: #{a_call__.6}
  #allocation0 [shape = 'u32[]', space=smem, size = 0x4, offset = 0x4, fixed_abs, tag = 'smem constant byte address 0x4 - core index']
  #allocation1 [shape = 'u32[144,128]{1,0:T(1,128)}', space=vmem, size = 0x12000, scoped, tag = 'internal scratch']
  #allocation2 [shape = 'f32[256,256]{1,0:T(8,128)}', space=vmem, size = 0x40000, scoped, tag = 'scratch operand']
  %s0 = inlined_call_operand.vmem [shape: bf16[512,64], index: 0, kind: input, shape index: {}]
  %s1 = inlined_call_operand.vmem [shape: bf16[64,256], index: 1, kind: input, shape index: {}]
  %s2 = inlined_call_operand.vmem [shape: f32[1,256], index: 2, kind: input, shape index: {}]
  %s3 = inlined_call_operand.vmem [shape: f32[512,256], index: 3, kind: output, shape index: {}]
  %s4 = sld [smem:[#allocation0]]
  $region53: #{a_call__.6} parent=0
    _
  %s6 = ssub.s32 1, %s4
  %s7 = scalar_select 0, %s6, %s4
  loop: start=0, step=1, limit=4
  $region2: #{a_call__.6} parent=0 // loop_pre_header
    _
  $region3: #{a_call__.6} parent=0 // loop_header
    %s9 = sphi 0, %s13
    %p10 = scmp.ge.s32.totalorder %s9, 4
    %s16 = sphi 0, %s28
    %s17 = sphi 0, %s24
    %s18 = sphi 0, %s16
    %s19 = sphi 0, %s17
    %s20 = sphi 0, %s18
    %s21 = sphi 0, %s19
    %s33 = sphi 0, %s35
    %s36 = sphi 0, %s33
    %s37 = sphi 0, %s36
    %s53 = sphi 0, %s37
    %s59 = sphi 0, %s61
    %s62 = sphi 0, %s59
    %s63 = sphi 0, %s62
    %s79 = sphi 0, %s63
    %s83 = sphi 0, %s83
    %s85 = sphi 0, %s83
    %s86 = sphi 0, %s85
    %s100 = sphi 0, %s86
    %s106 = sphi 0, %s108
    %s109 = sphi 0, %s106
    %s110 = sphi 0, %s109
    %s126 = sphi 0, %s110
  $region4: #{a_call__.6} parent=0 // loop_header_branch
    %12 = sbr.rel (%p10) target = $region8
  $region5: #{a_call__.6} parent=0 // loop_body
    %s14 = ssub.s32 %s9, 1
    %s15 = ssub.s32 %s9, 2
    %s22 = sadd.s32 1, %s17
    %p23 = scmp.ge.s32.totalorder %s22, 1
    %s24 = scalar_select %p23, 0, %s22
    %s25 = sadd.s32 1, %s16
    %s26 = scalar_select %p23, %s25, %s16
    %p27 = scmp.ge.s32.totalorder %s26, 2
    %s28 = scalar_select %p27, 0, %s26
    %s29 = ssub.s32 %s16, %s28
    %s30 = ssub.s32 %s17, %s24
    %s31 = sor.u32 %s29, %s30
    %p32 = scmp.eq.s32.totalorder %s31, 0
    %s34 = sadd.s32 %s33, 1
    %s35 = scalar_select %p32, %s33, %s34
    %p38 = pneg %p32
    %p39 = scmp.eq.s32.totalorder %s9, 1
    %p40 = por %p38, %p39
    %p41 = scmp.ne.s32.totalorder %s33, %s36
    %p42 = scmp.eq.s32.totalorder %s9, 0
    %p43 = por %p41, %p42
    %p44 = scmp.ne.s32.totalorder %s33, %s36
    %p45 = scmp.eq.s32.totalorder %s14, 1
    %p46 = por %p44, %p45
    %p47 = scmp.ne.s32.totalorder %s36, %s37
    %p48 = scmp.eq.s32.totalorder %s14, 0
    %p49 = por %p47, %p48
    %p50 = scmp.ne.s32.totalorder %s36, %s37
    %p51 = scmp.eq.s32.totalorder %s15, 1
    %p52 = por %p50, %p51
    %p54 = scmp.ne.s32.totalorder %s37, %s53
    %p55 = scmp.eq.s32.totalorder %s15, 0
    %p56 = por %p54, %p55
    %s57 = ssub.s32 %s17, %s24
    %p58 = scmp.eq.s32.totalorder %s57, 0
    %s60 = sadd.s32 %s59, 1
    %s61 = scalar_select %p58, %s59, %s60
    %p64 = pneg %p58
    %p65 = scmp.eq.s32.totalorder %s9, 1
    %p66 = por %p64, %p65
    %p67 = scmp.ne.s32.totalorder %s59, %s62
    %p68 = scmp.eq.s32.totalorder %s9, 0
    %p69 = por %p67, %p68
    %p70 = scmp.ne.s32.totalorder %s59, %s62
    %p71 = scmp.eq.s32.totalorder %s14, 1
    %p72 = por %p70, %p71
    %p73 = scmp.ne.s32.totalorder %s62, %s63
    %p74 = scmp.eq.s32.totalorder %s14, 0
    %p75 = por %p73, %p74
    %p76 = scmp.ne.s32.totalorder %s62, %s63
    %p77 = scmp.eq.s32.totalorder %s15, 1
    %p78 = por %p76, %p77
    %p80 = scmp.ne.s32.totalorder %s63, %s79
    %p81 = scmp.eq.s32.totalorder %s15, 0
    %p82 = por %p80, %p81
    %s84 = sadd.s32 %s83, 1
    %p87 = scmp.eq.s32.totalorder %s9, 1
    %p88 = scmp.ne.s32.totalorder %s83, %s85
    %p89 = scmp.eq.s32.totalorder %s9, 0
    %p90 = por %p88, %p89
    %p91 = scmp.ne.s32.totalorder %s83, %s85
    %p92 = scmp.eq.s32.totalorder %s14, 1
    %p93 = por %p91, %p92
    %p94 = scmp.ne.s32.totalorder %s85, %s86
    %p95 = scmp.eq.s32.totalorder %s14, 0
    %p96 = por %p94, %p95
    %p97 = scmp.ne.s32.totalorder %s85, %s86
    %p98 = scmp.eq.s32.totalorder %s15, 1
    %p99 = por %p97, %p98
    %p101 = scmp.ne.s32.totalorder %s86, %s100
    %p102 = scmp.eq.s32.totalorder %s15, 0
    %p103 = por %p101, %p102
    %s104 = ssub.s32 %s16, %s28
    %p105 = scmp.eq.s32.totalorder %s104, 0
    %s107 = sadd.s32 %s106, 1
    %s108 = scalar_select %p105, %s106, %s107
    %p111 = pneg %p105
    %p112 = scmp.eq.s32.totalorder %s9, 1
    %p113 = por %p111, %p112
    %p114 = scmp.ne.s32.totalorder %s106, %s109
    %p115 = scmp.eq.s32.totalorder %s9, 0
    %p116 = por %p114, %p115
    %p117 = scmp.ne.s32.totalorder %s106, %s109
    %p118 = scmp.eq.s32.totalorder %s14, 1
    %p119 = por %p117, %p118
    %p120 = scmp.ne.s32.totalorder %s109, %s110
    %p121 = scmp.eq.s32.totalorder %s14, 0
    %p122 = por %p120, %p121
    %p123 = scmp.ne.s32.totalorder %s109, %s110
    %p124 = scmp.eq.s32.totalorder %s15, 1
    %p125 = por %p123, %p124
    %p127 = scmp.ne.s32.totalorder %s110, %s126
    %p128 = scmp.eq.s32.totalorder %s15, 0
    %p129 = por %p127, %p128
    %p130 = scmp.le.s32.totalorder 1, %s9
    %p131 = scmp.lt.s32.totalorder %s9, 3
    %p132 = pnand %p130, %p131
    %p133 = pneg %p132
    // Predicated region
    $region9: #{a_call__.6} parent=5 // pred_check
      _
    $region10: #{a_call__.6} parent=5 // pred_check_branch
      %135 = sbr.rel (%p132) target = $region12
    $region11: #{a_call__.6} parent=5 // pred_region
      %s136 = ssub.s32 %s9, 1
      // Predicated region
      $region13: #{a_call__.6} parent=11 // pred_check
        %p137 = pneg %p75
      $region14: #{a_call__.6} parent=11 // pred_check_branch
        %139 = sbr.rel (%p137) target = $region16
      $region15: #{a_call__.6} parent=11 // pred_region
        %s140 = smul.u32 8, %s19
        %p141 = scmp.lt.s32.totalorder %s140, 7
        %s142 = scalar_select %p141, %s140, 7
        %s143 = smul.addr %s142, 2
        %s144 = smul.addr %s143, 4
        %s145 = scalar_lea.vmem %s1, %s144
        %s146 = smul.u32 8, %s19
      $region16: #{a_call__.6} parent=11 // pred_fallthru
        _
      // Predicated region
      $region17: #{a_call__.6} parent=11 // pred_check
        %p147 = pneg %p96
      $region18: #{a_call__.6} parent=11 // pred_check_branch
        %149 = sbr.rel (%p147) target = $region20
      $region19: #{a_call__.6} parent=11 // pred_region
        _
      $region20: #{a_call__.6} parent=11 // pred_fallthru
        _
    $region12: #{a_call__.6} parent=5 // pred_fallthru
      _
    %p150 = scmp.lt.s32.totalorder %s9, 2
    // Predicated region
    $region21: #{a_call__.6} parent=5 // pred_check
      %p151 = pneg %p150
    $region22: #{a_call__.6} parent=5 // pred_check_branch
      %153 = sbr.rel (%p151) target = $region24
    $region23: #{a_call__.6} parent=5 // pred_region
      // Predicated region
      $region25: #{a_call__.6} parent=23 // pred_check
        %p154 = pneg %p43
      $region26: #{a_call__.6} parent=23 // pred_check_branch
        %156 = sbr.rel (%p154) target = $region28
      $region27: #{a_call__.6} parent=23 // pred_region
        %s157 = smul.u32 32, %s16
        %p158 = scmp.lt.s32.totalorder %s157, 63
        %s159 = scalar_select %p158, %s157, 63
        %p160 = scmp.lt.s32.totalorder %s17, 0
        %s161 = scalar_select %p160, %s17, 0
        %s162 = sadd.s32 %s161, %s159
        %s163 = smul.addr %s162, 4
        %s164 = scalar_lea.vmem %s0, %s163
        %s165 = smul.u32 32, %s16
      $region28: #{a_call__.6} parent=23 // pred_fallthru
        _
    $region24: #{a_call__.6} parent=5 // pred_fallthru
      _
    %p166 = scmp.le.s32.totalorder 1, %s9
    %p167 = scmp.lt.s32.totalorder %s9, 3
    %p168 = pnand %p166, %p167
    %p169 = pneg %p168
    // Predicated region
    $region29: #{a_call__.6} parent=5 // pred_check
      _
    $region30: #{a_call__.6} parent=5 // pred_check_branch
      %171 = sbr.rel (%p168) target = $region32
    $region31: #{a_call__.6} parent=5 // pred_region
      %s172 = ssub.s32 %s9, 1
      %s173 = smul.u32 32, %s18
      %p174 = scmp.lt.s32.totalorder %s173, 63
      %s175 = scalar_select %p174, %s173, 63
      %p176 = scmp.lt.s32.totalorder %s19, 0
      %s177 = scalar_select %p176, %s19, 0
      %s178 = sadd.s32 %s177, %s175
      %s179 = smul.addr %s178, 4
      %s180 = scalar_lea.vmem %s0, %s179
      %p181 = pneg %p49
      %p182 = pneg %p46
      %s183 = smul.u32 8, %s19
      %p184 = scmp.lt.s32.totalorder %s183, 7
      %s185 = scalar_select %p184, %s183, 7
      %s186 = smul.addr %s185, 2
      %s187 = smul.addr %s186, 4
      %s188 = scalar_lea.vmem %s1, %s187
      %p189 = pneg %p75
      %p190 = pneg %p72
      %p191 = pneg %p96
      %p192 = pneg %p93
      %p193 = pneg %p122
      %p194 = pneg %p119
      %s195 = smul.u32 32, %s18
      %p196 = scmp.lt.s32.totalorder %s195, 63
      %s197 = scalar_select %p196, %s195, 63
      %s198 = smul.addr %s197, 2
      %s199 = smul.addr %s198, 8
      %s200 = scalar_lea.vmem %s3, %s199
      %s201 = smul.u32 32, %s18
      %p202 = scmp.lt.s32.totalorder %s201, 63
      %s203 = scalar_select %p202, %s201, 63
      %p204 = scmp.lt.s32.totalorder %s19, 0
      %s205 = scalar_select %p204, %s19, 0
      %s206 = sadd.s32 %s205, %s203
      %s207 = smul.addr %s206, 4
      %s208 = scalar_lea.vmem %s0, %s207
      %s209 = smul.u32 32, %s18
      %s210 = smul.u32 8, %s19
      %p211 = scmp.lt.s32.totalorder %s210, 7
      %s212 = scalar_select %p211, %s210, 7
      %s213 = smul.addr %s212, 2
      %s214 = smul.addr %s213, 4
      %s215 = scalar_lea.vmem %s1, %s214
      %s216 = smul.u32 8, %s19
      %s217 = smul.u32 32, %s18
      %p218 = scmp.lt.s32.totalorder %s217, 63
      %s219 = scalar_select %p218, %s217, 63
      %s220 = smul.addr %s219, 2
      %s221 = smul.addr %s220, 8
      %s222 = scalar_lea.vmem %s3, %s221
      %s223 = smul.u32 32, %s18
      %p225 = scmp.eq.s32.totalorder %s19, 0
      // Predicated region
      $region33: #{a_call__.6} parent=31 // pred_check
        %p226 = pneg %p225
      $region34: #{a_call__.6} parent=31 // pred_check_branch
        %228 = sbr.rel (%p226) target = $region36
      $region35: #{a_call__.6} parent=31 // pred_region
        %229 = vst [vmem:[#allocation2] sm:$0xff] 0.0
        %230 = vst [vmem:[#allocation2 + $0x8] sm:$0xff] 0.0
        %231 = vst [vmem:[#allocation2 + $0x10] sm:$0xff] 0.0
        %232 = vst [vmem:[#allocation2 + $0x18] sm:$0xff] 0.0
        %233 = vst [vmem:[#allocation2 + $0x20] sm:$0xff] 0.0
        %234 = vst [vmem:[#allocation2 + $0x28] sm:$0xff] 0.0
        %235 = vst [vmem:[#allocation2 + $0x30] sm:$0xff] 0.0
        %236 = vst [vmem:[#allocation2 + $0x38] sm:$0xff] 0.0
        %237 = vst [vmem:[#allocation2 + $0x40] sm:$0xff] 0.0
        %238 = vst [vmem:[#allocation2 + $0x48] sm:$0xff] 0.0
        %239 = vst [vmem:[#allocation2 + $0x50] sm:$0xff] 0.0
        %240 = vst [vmem:[#allocation2 + $0x58] sm:$0xff] 0.0
        %241 = vst [vmem:[#allocation2 + $0x60] sm:$0xff] 0.0
        %242 = vst [vmem:[#allocation2 + $0x68] sm:$0xff] 0.0
        %243 = vst [vmem:[#allocation2 + $0x70] sm:$0xff] 0.0
        %244 = vst [vmem:[#allocation2 + $0x78] sm:$0xff] 0.0
        %245 = vst [vmem:[#allocation2 + $0x80] sm:$0xff] 0.0
        %246 = vst [vmem:[#allocation2 + $0x88] sm:$0xff] 0.0
        %247 = vst [vmem:[#allocation2 + $0x90] sm:$0xff] 0.0
        %248 = vst [vmem:[#allocation2 + $0x98] sm:$0xff] 0.0
        %249 = vst [vmem:[#allocation2 + $0xa0] sm:$0xff] 0.0
        %250 = vst [vmem:[#allocation2 + $0xa8] sm:$0xff] 0.0
        %251 = vst [vmem:[#allocation2 + $0xb0] sm:$0xff] 0.0
        %252 = vst [vmem:[#allocation2 + $0xb8] sm:$0xff] 0.0
        %253 = vst [vmem:[#allocation2 + $0xc0] sm:$0xff] 0.0
        %254 = vst [vmem:[#allocation2 + $0xc8] sm:$0xff] 0.0
        %255 = vst [vmem:[#allocation2 + $0xd0] sm:$0xff] 0.0
        %256 = vst [vmem:[#allocation2 + $0xd8] sm:$0xff] 0.0
        %257 = vst [vmem:[#allocation2 + $0xe0] sm:$0xff] 0.0
        %258 = vst [vmem:[#allocation2 + $0xe8] sm:$0xff] 0.0
        %259 = vst [vmem:[#allocation2 + $0xf0] sm:$0xff] 0.0
        %260 = vst [vmem:[#allocation2 + $0xf8] sm:$0xff] 0.0
        %261 = vst [vmem:[#allocation2 + $0x100] sm:$0xff] 0.0
        %262 = vst [vmem:[#allocation2 + $0x108] sm:$0xff] 0.0
        %263 = vst [vmem:[#allocation2 + $0x110] sm:$0xff] 0.0
        %264 = vst [vmem:[#allocation2 + $0x118] sm:$0xff] 0.0
        %265 = vst [vmem:[#allocation2 + $0x120] sm:$0xff] 0.0
        %266 = vst [vmem:[#allocation2 + $0x128] sm:$0xff] 0.0
        %267 = vst [vmem:[#allocation2 + $0x130] sm:$0xff] 0.0
        %268 = vst [vmem:[#allocation2 + $0x138] sm:$0xff] 0.0
        %269 = vst [vmem:[#allocation2 + $0x140] sm:$0xff] 0.0
        %270 = vst [vmem:[#allocation2 + $0x148] sm:$0xff] 0.0
        %271 = vst [vmem:[#allocation2 + $0x150] sm:$0xff] 0.0
        %272 = vst [vmem:[#allocation2 + $0x158] sm:$0xff] 0.0
        %273 = vst [vmem:[#allocation2 + $0x160] sm:$0xff] 0.0
        %274 = vst [vmem:[#allocation2 + $0x168] sm:$0xff] 0.0
        %275 = vst [vmem:[#allocation2 + $0x170] sm:$0xff] 0.0
        %276 = vst [vmem:[#allocation2 + $0x178] sm:$0xff] 0.0
        %277 = vst [vmem:[#allocation2 + $0x180] sm:$0xff] 0.0
        %278 = vst [vmem:[#allocation2 + $0x188] sm:$0xff] 0.0
        %279 = vst [vmem:[#allocation2 + $0x190] sm:$0xff] 0.0
        %280 = vst [vmem:[#allocation2 + $0x198] sm:$0xff] 0.0
        %281 = vst [vmem:[#allocation2 + $0x1a0] sm:$0xff] 0.0
        %282 = vst [vmem:[#allocation2 + $0x1a8] sm:$0xff] 0.0
        %283 = vst [vmem:[#allocation2 + $0x1b0] sm:$0xff] 0.0
        %284 = vst [vmem:[#allocation2 + $0x1b8] sm:$0xff] 0.0
        %285 = vst [vmem:[#allocation2 + $0x1c0] sm:$0xff] 0.0
        %286 = vst [vmem:[#allocation2 + $0x1c8] sm:$0xff] 0.0
        %287 = vst [vmem:[#allocation2 + $0x1d0] sm:$0xff] 0.0
        %288 = vst [vmem:[#allocation2 + $0x1d8] sm:$0xff] 0.0
        %289 = vst [vmem:[#allocation2 + $0x1e0] sm:$0xff] 0.0
        %290 = vst [vmem:[#allocation2 + $0x1e8] sm:$0xff] 0.0
        %291 = vst [vmem:[#allocation2 + $0x1f0] sm:$0xff] 0.0
        %292 = vst [vmem:[#allocation2 + $0x1f8] sm:$0xff] 0.0
      $region36: #{a_call__.6} parent=31 // pred_fallthru
        _
      %v293 = vld [vmem:[#allocation2] sm:$0xff]
      %v294 = vld [vmem:[#allocation2 + $0x8] sm:$0xff]
      %v295 = vld [vmem:[#allocation2 + $0x10] sm:$0xff]
      %v296 = vld [vmem:[#allocation2 + $0x18] sm:$0xff]
      %v297 = vld [vmem:[#allocation2 + $0x20] sm:$0xff]
      %v298 = vld [vmem:[#allocation2 + $0x28] sm:$0xff]
      %v299 = vld [vmem:[#allocation2 + $0x30] sm:$0xff]
      %v300 = vld [vmem:[#allocation2 + $0x38] sm:$0xff]
      %v301 = vld [vmem:[#allocation2 + $0x40] sm:$0xff]
      %v302 = vld [vmem:[#allocation2 + $0x48] sm:$0xff]
      %v303 = vld [vmem:[#allocation2 + $0x50] sm:$0xff]
      %v304 = vld [vmem:[#allocation2 + $0x58] sm:$0xff]
      %v305 = vld [vmem:[#allocation2 + $0x60] sm:$0xff]
      %v306 = vld [vmem:[#allocation2 + $0x68] sm:$0xff]
      %v307 = vld [vmem:[#allocation2 + $0x70] sm:$0xff]
      %v308 = vld [vmem:[#allocation2 + $0x78] sm:$0xff]
      %v309 = vld [vmem:[#allocation2 + $0x80] sm:$0xff]
      %v310 = vld [vmem:[#allocation2 + $0x88] sm:$0xff]
      %v311 = vld [vmem:[#allocation2 + $0x90] sm:$0xff]
      %v312 = vld [vmem:[#allocation2 + $0x98] sm:$0xff]
      %v313 = vld [vmem:[#allocation2 + $0xa0] sm:$0xff]
      %v314 = vld [vmem:[#allocation2 + $0xa8] sm:$0xff]
      %v315 = vld [vmem:[#allocation2 + $0xb0] sm:$0xff]
      %v316 = vld [vmem:[#allocation2 + $0xb8] sm:$0xff]
      %v317 = vld [vmem:[#allocation2 + $0xc0] sm:$0xff]
      %v318 = vld [vmem:[#allocation2 + $0xc8] sm:$0xff]
      %v319 = vld [vmem:[#allocation2 + $0xd0] sm:$0xff]
      %v320 = vld [vmem:[#allocation2 + $0xd8] sm:$0xff]
      %v321 = vld [vmem:[#allocation2 + $0xe0] sm:$0xff]
      %v322 = vld [vmem:[#allocation2 + $0xe8] sm:$0xff]
      %v323 = vld [vmem:[#allocation2 + $0xf0] sm:$0xff]
      %v324 = vld [vmem:[#allocation2 + $0xf8] sm:$0xff]
      %v325 = vld [vmem:[#allocation2 + $0x100] sm:$0xff]
      %v326 = vld [vmem:[#allocation2 + $0x108] sm:$0xff]
      %v327 = vld [vmem:[#allocation2 + $0x110] sm:$0xff]
      %v328 = vld [vmem:[#allocation2 + $0x118] sm:$0xff]
      %v329 = vld [vmem:[#allocation2 + $0x120] sm:$0xff]
      %v330 = vld [vmem:[#allocation2 + $0x128] sm:$0xff]
      %v331 = vld [vmem:[#allocation2 + $0x130] sm:$0xff]
      %v332 = vld [vmem:[#allocation2 + $0x138] sm:$0xff]
      %v333 = vld [vmem:[#allocation2 + $0x140] sm:$0xff]
      %v334 = vld [vmem:[#allocation2 + $0x148] sm:$0xff]
      %v335 = vld [vmem:[#allocation2 + $0x150] sm:$0xff]
      %v336 = vld [vmem:[#allocation2 + $0x158] sm:$0xff]
      %v337 = vld [vmem:[#allocation2 + $0x160] sm:$0xff]
      %v338 = vld [vmem:[#allocation2 + $0x168] sm:$0xff]
      %v339 = vld [vmem:[#allocation2 + $0x170] sm:$0xff]
      %v340 = vld [vmem:[#allocation2 + $0x178] sm:$0xff]
      %v341 = vld [vmem:[#allocation2 + $0x180] sm:$0xff]
      %v342 = vld [vmem:[#allocation2 + $0x188] sm:$0xff]
      %v343 = vld [vmem:[#allocation2 + $0x190] sm:$0xff]
      %v344 = vld [vmem:[#allocation2 + $0x198] sm:$0xff]
      %v345 = vld [vmem:[#allocation2 + $0x1a0] sm:$0xff]
      %v346 = vld [vmem:[#allocation2 + $0x1a8] sm:$0xff]
      %v347 = vld [vmem:[#allocation2 + $0x1b0] sm:$0xff]
      %v348 = vld [vmem:[#allocation2 + $0x1b8] sm:$0xff]
      %v349 = vld [vmem:[#allocation2 + $0x1c0] sm:$0xff]
      %v350 = vld [vmem:[#allocation2 + $0x1c8] sm:$0xff]
      %v351 = vld [vmem:[#allocation2 + $0x1d0] sm:$0xff]
      %v352 = vld [vmem:[#allocation2 + $0x1d8] sm:$0xff]
      %v353 = vld [vmem:[#allocation2 + $0x1e0] sm:$0xff]
      %v354 = vld [vmem:[#allocation2 + $0x1e8] sm:$0xff]
      %v355 = vld [vmem:[#allocation2 + $0x1f0] sm:$0xff]
      %v356 = vld [vmem:[#allocation2 + $0x1f8] sm:$0xff]
      %v357 = vld [vmem:[%s208] sm:$0xf]
      %v358 = vld [vmem:[%s208 + $0x4] sm:$0xf]
      %v359 = vld [vmem:[%s208 + $0x8] sm:$0xf]
      %v360 = vld [vmem:[%s208 + $0xc] sm:$0xf]
      %v361 = vld [vmem:[%s208 + $0x10] sm:$0xf]
      %v362 = vld [vmem:[%s208 + $0x14] sm:$0xf]
      %v363 = vld [vmem:[%s208 + $0x18] sm:$0xf]
      %v364 = vld [vmem:[%s208 + $0x1c] sm:$0xf]
      %v365 = vld [vmem:[%s208 + $0x20] sm:$0xf]
      %v366 = vld [vmem:[%s208 + $0x24] sm:$0xf]
      %v367 = vld [vmem:[%s208 + $0x28] sm:$0xf]
      %v368 = vld [vmem:[%s208 + $0x2c] sm:$0xf]
      %v369 = vld [vmem:[%s208 + $0x30] sm:$0xf]
      %v370 = vld [vmem:[%s208 + $0x34] sm:$0xf]
      %v371 = vld [vmem:[%s208 + $0x38] sm:$0xf]
      %v372 = vld [vmem:[%s208 + $0x3c] sm:$0xf]
      %v373 = vld [vmem:[%s208 + $0x40] sm:$0xf]
      %v374 = vld [vmem:[%s208 + $0x44] sm:$0xf]
      %v375 = vld [vmem:[%s208 + $0x48] sm:$0xf]
      %v376 = vld [vmem:[%s208 + $0x4c] sm:$0xf]
      %v377 = vld [vmem:[%s208 + $0x50] sm:$0xf]
      %v378 = vld [vmem:[%s208 + $0x54] sm:$0xf]
      %v379 = vld [vmem:[%s208 + $0x58] sm:$0xf]
      %v380 = vld [vmem:[%s208 + $0x5c] sm:$0xf]
      %v381 = vld [vmem:[%s208 + $0x60] sm:$0xf]
      %v382 = vld [vmem:[%s208 + $0x64] sm:$0xf]
      %v383 = vld [vmem:[%s208 + $0x68] sm:$0xf]
      %v384 = vld [vmem:[%s208 + $0x6c] sm:$0xf]
      %v385 = vld [vmem:[%s208 + $0x70] sm:$0xf]
      %v386 = vld [vmem:[%s208 + $0x74] sm:$0xf]
      %v387 = vld [vmem:[%s208 + $0x78] sm:$0xf]
      %v388 = vld [vmem:[%s208 + $0x7c] sm:$0xf]
      %v389 = vld [vmem:[%s215] sm:$0xff]
      %v390 = vld [vmem:[%s215 + $0x8] sm:$0xff]
      %v391 = vld [vmem:[%s215 + $0x10] sm:$0xff]
      %v392 = vld [vmem:[%s215 + $0x18] sm:$0xff]
      %v393 = vld [vmem:[%s215 + $0x20] sm:$0xff]
      %v394 = vld [vmem:[%s215 + $0x28] sm:$0xff]
      %v395 = vld [vmem:[%s215 + $0x30] sm:$0xff]
      %v396 = vld [vmem:[%s215 + $0x38] sm:$0xff]
      %v429 = vunpack.c.l.b16 %v357
      %v430 = vunpack.c.l.b16 %v358
      %v431 = vunpack.c.l.b16 %v359
      %v432 = vunpack.c.l.b16 %v360
      %v433 = vunpack.c.l.b16 %v361
      %v434 = vunpack.c.l.b16 %v362
      %v435 = vunpack.c.l.b16 %v363
      %v436 = vunpack.c.l.b16 %v364
      %v437 = vunpack.c.l.b16 %v365
      %v438 = vunpack.c.l.b16 %v366
      %v439 = vunpack.c.l.b16 %v367
      %v440 = vunpack.c.l.b16 %v368
      %v441 = vunpack.c.l.b16 %v369
      %v442 = vunpack.c.l.b16 %v370
      %v443 = vunpack.c.l.b16 %v371
      %v444 = vunpack.c.l.b16 %v372
      %v445 = vunpack.c.l.b16 %v373
      %v446 = vunpack.c.l.b16 %v374
      %v447 = vunpack.c.l.b16 %v375
      %v448 = vunpack.c.l.b16 %v376
      %v449 = vunpack.c.l.b16 %v377
      %v450 = vunpack.c.l.b16 %v378
      %v451 = vunpack.c.l.b16 %v379
      %v452 = vunpack.c.l.b16 %v380
      %v453 = vunpack.c.l.b16 %v381
      %v454 = vunpack.c.l.b16 %v382
      %v455 = vunpack.c.l.b16 %v383
      %v456 = vunpack.c.l.b16 %v384
      %v457 = vunpack.c.l.b16 %v385
      %v458 = vunpack.c.l.b16 %v386
      %v459 = vunpack.c.l.b16 %v387
      %v460 = vunpack.c.l.b16 %v388
      %v461 = vpack.c.b16 %v430, %v429
      %v462 = vpack.c.b16 %v432, %v431
      %v463 = vpack.c.b16 %v434, %v433
      %v464 = vpack.c.b16 %v436, %v435
      %v465 = vpack.c.b16 %v438, %v437
      %v466 = vpack.c.b16 %v440, %v439
      %v467 = vpack.c.b16 %v442, %v441
      %v468 = vpack.c.b16 %v444, %v443
      %v469 = vpack.c.b16 %v446, %v445
      %v470 = vpack.c.b16 %v448, %v447
      %v471 = vpack.c.b16 %v450, %v449
      %v472 = vpack.c.b16 %v452, %v451
      %v473 = vpack.c.b16 %v454, %v453
      %v474 = vpack.c.b16 %v456, %v455
      %v475 = vpack.c.b16 %v458, %v457
      %v476 = vpack.c.b16 %v460, %v459
      %v485 = vunpack.c.l.b16 %v389
      %v486 = vunpack.c.h.b16 %v389
      %v487 = vunpack.c.l.b16 %v390
      %v488 = vunpack.c.h.b16 %v390
      %v489 = vunpack.c.l.b16 %v391
      %v490 = vunpack.c.h.b16 %v391
      %v491 = vunpack.c.l.b16 %v392
      %v492 = vunpack.c.h.b16 %v392
      %v493 = vunpack.c.l.b16 %v393
      %v494 = vunpack.c.h.b16 %v393
      %v495 = vunpack.c.l.b16 %v394
      %v496 = vunpack.c.h.b16 %v394
      %v497 = vunpack.c.l.b16 %v395
      %v498 = vunpack.c.h.b16 %v395
      %v499 = vunpack.c.l.b16 %v396
      %v500 = vunpack.c.h.b16 %v396
      %v501 = vpack.c.b16 %v487, %v485
      %v502 = vpack.c.b16 %v488, %v486
      %v503 = vpack.c.b16 %v491, %v489
      %v504 = vpack.c.b16 %v492, %v490
      %v505 = vpack.c.b16 %v495, %v493
      %v506 = vpack.c.b16 %v496, %v494
      %v507 = vpack.c.b16 %v499, %v497
      %v508 = vpack.c.b16 %v500, %v498
      %vm517 = vcmask 523264
      %v519 = vsel %vm517, %v461, 0
      %v522 = vsel %vm517, %v462, 0
      %v525 = vsel %vm517, %v463, 0
      %v528 = vsel %vm517, %v464, 0
      %v531 = vsel %vm517, %v465, 0
      %v534 = vsel %vm517, %v466, 0
      %v537 = vsel %vm517, %v467, 0
      %v540 = vsel %vm517, %v468, 0
      %v543 = vsel %vm517, %v469, 0
      %v546 = vsel %vm517, %v470, 0
      %v549 = vsel %vm517, %v471, 0
      %v552 = vsel %vm517, %v472, 0
      %v555 = vsel %vm517, %v473, 0
      %v558 = vsel %vm517, %v474, 0
      %v561 = vsel %vm517, %v475, 0
      %v564 = vsel %vm517, %v476, 0
      %566 = vmatprep.subr.bf16.mxu0 %v502
      %567 = vmatpush1.bf16.msra.mxu0 %v501
      %568 = vmatprep.subr.bf16.mxu0 %v504
      %569 = vmatpush1.bf16.msra.mxu0 %v503
      %570 = vmatprep.subr.bf16.mxu0 %v506
      %571 = vmatpush1.bf16.msra.mxu0 %v505
      %572 = vmatprep.subr.bf16.mxu0 %v508
      %573 = vmatpush1.bf16.msra.mxu0 %v507
      %574 = vmatprep.subr.bf16.mxu0 0
      %575 = vmatpush1.bf16.msra.mxu0 0
      %576 = vmatprep.subr.bf16.mxu0 0
      %577 = vmatpush1.bf16.msra.mxu0 0
      %578 = vmatprep.subr.bf16.mxu0 0
      %579 = vmatpush1.bf16.msra.mxu0 0
      %580 = vmatprep.subr.bf16.mxu0 0
      %581 = vmatpush1.bf16.msra.mxu0 0
      %582 = vmatprep.subr.bf16.mxu0 0
      %583 = vmatpush1.bf16.msra.mxu0 0
      %584 = vmatprep.subr.bf16.mxu0 0
      %585 = vmatpush1.bf16.msra.mxu0 0
      %586 = vmatprep.subr.bf16.mxu0 0
      %587 = vmatpush1.bf16.msra.mxu0 0
      %588 = vmatprep.subr.bf16.mxu0 0
      %589 = vmatpush1.bf16.msra.mxu0 0
      %590 = vmatprep.subr.bf16.mxu0 0
      %591 = vmatpush1.bf16.msra.mxu0 0
      %592 = vmatprep.subr.bf16.mxu0 0
      %593 = vmatpush1.bf16.msra.mxu0 0
      %594 = vmatprep.subr.bf16.mxu0 0
      %595 = vmatpush1.bf16.msra.mxu0 0
      %596 = vmatprep.subr.bf16.mxu0 0
      %597 = vmatpush1.bf16.msra.mxu0 0
      %598 = vmatprep.mubr.bf16.mxu0 0
      %599 = vmatmul.mubr.bf16.gmra.mrb[0].mxu0 %v519
      %v600 = vpop.f32.mrb[0].mxu0
      %v601 = vadd.f32 0.0, %v600
      %v602 = vpop.f32.mrb[0].mxu0
      %v603 = vadd.f32 0.0, %v602
      %v604 = vpop.f32.mrb[0].mxu0
      %v605 = vadd.f32 0.0, %v604
      %v606 = vpop.f32.mrb[0].mxu0
      %v607 = vadd.f32 0.0, %v606
      %608 = vmatprep.mubr.bf16.mxu0 0
      %609 = vmatmul.mubr.bf16.gmra.mrb[0].mxu0 %v522
      %v610 = vpop.f32.mrb[0].mxu0
      %v611 = vadd.f32 0.0, %v610
      %v612 = vpop.f32.mrb[0].mxu0
      %v613 = vadd.f32 0.0, %v612
      %v614 = vpop.f32.mrb[0].mxu0
      %v615 = vadd.f32 0.0, %v614
      %v616 = vpop.f32.mrb[0].mxu0
      %v617 = vadd.f32 0.0, %v616
      %618 = vmatprep.mubr.bf16.mxu0 0
      %619 = vmatmul.mubr.bf16.gmra.mrb[0].mxu0 %v525
      %v620 = vpop.f32.mrb[0].mxu0
      %v621 = vadd.f32 0.0, %v620
      %v622 = vpop.f32.mrb[0].mxu0
      %v623 = vadd.f32 0.0, %v622
      %v624 = vpop.f32.mrb[0].mxu0
      %v625 = vadd.f32 0.0, %v624
      %v626 = vpop.f32.mrb[0].mxu0
      %v627 = vadd.f32 0.0, %v626
      %628 = vmatprep.mubr.bf16.mxu0 0
      %629 = vmatmul.mubr.bf16.gmra.mrb[0].mxu0 %v528
      %v630 = vpop.f32.mrb[0].mxu0
      %v631 = vadd.f32 0.0, %v630
      %v632 = vpop.f32.mrb[0].mxu0
      %v633 = vadd.f32 0.0, %v632
      %v634 = vpop.f32.mrb[0].mxu0
      %v635 = vadd.f32 0.0, %v634
      %v636 = vpop.f32.mrb[0].mxu0
      %v637 = vadd.f32 0.0, %v636
      %638 = vmatprep.mubr.bf16.mxu0 0
      %639 = vmatmul.mubr.bf16.gmra.mrb[0].mxu0 %v531
      %v640 = vpop.f32.mrb[0].mxu0
      %v641 = vadd.f32 0.0, %v640
      %v642 = vpop.f32.mrb[0].mxu0
      %v643 = vadd.f32 0.0, %v642
      %v644 = vpop.f32.mrb[0].mxu0
      %v645 = vadd.f32 0.0, %v644
      %v646 = vpop.f32.mrb[0].mxu0
      %v647 = vadd.f32 0.0, %v646
      %648 = vmatprep.mubr.bf16.mxu0 0
      %649 = vmatmul.mubr.bf16.gmra.mrb[0].mxu0 %v534
      %v650 = vpop.f32.mrb[0].mxu0
      %v651 = vadd.f32 0.0, %v650
      %v652 = vpop.f32.mrb[0].mxu0
      %v653 = vadd.f32 0.0, %v652
      %v654 = vpop.f32.mrb[0].mxu0
      %v655 = vadd.f32 0.0, %v654
      %v656 = vpop.f32.mrb[0].mxu0
      %v657 = vadd.f32 0.0, %v656
      %658 = vmatprep.mubr.bf16.mxu0 0
      %659 = vmatmul.mubr.bf16.gmra.mrb[0].mxu0 %v537
      %v660 = vpop.f32.mrb[0].mxu0
      %v661 = vadd.f32 0.0, %v660
      %v662 = vpop.f32.mrb[0].mxu0
      %v663 = vadd.f32 0.0, %v662
      %v664 = vpop.f32.mrb[0].mxu0
      %v665 = vadd.f32 0.0, %v664
      %v666 = vpop.f32.mrb[0].mxu0
      %v667 = vadd.f32 0.0, %v666
      %668 = vmatprep.mubr.bf16.mxu0 0
      %669 = vmatmul.mubr.bf16.gmra.mrb[0].mxu0 %v540
      %v670 = vpop.f32.mrb[0].mxu0
      %v671 = vadd.f32 0.0, %v670
      %v672 = vpop.f32.mrb[0].mxu0
      %v673 = vadd.f32 0.0, %v672
      %v674 = vpop.f32.mrb[0].mxu0
      %v675 = vadd.f32 0.0, %v674
      %v676 = vpop.f32.mrb[0].mxu0
      %v677 = vadd.f32 0.0, %v676
      %678 = vmatprep.mubr.bf16.mxu0 0
      %679 = vmatmul.mubr.bf16.gmra.mrb[0].mxu0 %v543
      %v680 = vpop.f32.mrb[0].mxu0
      %v681 = vadd.f32 0.0, %v680
      %v682 = vpop.f32.mrb[0].mxu0
      %v683 = vadd.f32 0.0, %v682
      %v684 = vpop.f32.mrb[0].mxu0
      %v685 = vadd.f32 0.0, %v684
      %v686 = vpop.f32.mrb[0].mxu0
      %v687 = vadd.f32 0.0, %v686
      %688 = vmatprep.mubr.bf16.mxu0 0
      %689 = vmatmul.mubr.bf16.gmra.mrb[0].mxu0 %v546
      %v690 = vpop.f32.mrb[0].mxu0
      %v691 = vadd.f32 0.0, %v690
      %v692 = vpop.f32.mrb[0].mxu0
      %v693 = vadd.f32 0.0, %v692
      %v694 = vpop.f32.mrb[0].mxu0
      %v695 = vadd.f32 0.0, %v694
      %v696 = vpop.f32.mrb[0].mxu0
      %v697 = vadd.f32 0.0, %v696
      %698 = vmatprep.mubr.bf16.mxu0 0
      %699 = vmatmul.mubr.bf16.gmra.mrb[0].mxu0 %v549
      %v700 = vpop.f32.mrb[0].mxu0
      %v701 = vadd.f32 0.0, %v700
      %v702 = vpop.f32.mrb[0].mxu0
      %v703 = vadd.f32 0.0, %v702
      %v704 = vpop.f32.mrb[0].mxu0
      %v705 = vadd.f32 0.0, %v704
      %v706 = vpop.f32.mrb[0].mxu0
      %v707 = vadd.f32 0.0, %v706
      %708 = vmatprep.mubr.bf16.mxu0 0
      %709 = vmatmul.mubr.bf16.gmra.mrb[0].mxu0 %v552
      %v710 = vpop.f32.mrb[0].mxu0
      %v711 = vadd.f32 0.0, %v710
      %v712 = vpop.f32.mrb[0].mxu0
      %v713 = vadd.f32 0.0, %v712
      %v714 = vpop.f32.mrb[0].mxu0
      %v715 = vadd.f32 0.0, %v714
      %v716 = vpop.f32.mrb[0].mxu0
      %v717 = vadd.f32 0.0, %v716
      %718 = vmatprep.mubr.bf16.mxu0 0
      %719 = vmatmul.mubr.bf16.gmra.mrb[0].mxu0 %v555
      %v720 = vpop.f32.mrb[0].mxu0
      %v721 = vadd.f32 0.0, %v720
      %v722 = vpop.f32.mrb[0].mxu0
      %v723 = vadd.f32 0.0, %v722
      %v724 = vpop.f32.mrb[0].mxu0
      %v725 = vadd.f32 0.0, %v724
      %v726 = vpop.f32.mrb[0].mxu0
      %v727 = vadd.f32 0.0, %v726
      %728 = vmatprep.mubr.bf16.mxu0 0
      %729 = vmatmul.mubr.bf16.gmra.mrb[0].mxu0 %v558
      %v730 = vpop.f32.mrb[0].mxu0
      %v731 = vadd.f32 0.0, %v730
      %v732 = vpop.f32.mrb[0].mxu0
      %v733 = vadd.f32 0.0, %v732
      %v734 = vpop.f32.mrb[0].mxu0
      %v735 = vadd.f32 0.0, %v734
      %v736 = vpop.f32.mrb[0].mxu0
      %v737 = vadd.f32 0.0, %v736
      %738 = vmatprep.mubr.bf16.mxu0 0
      %739 = vmatmul.mubr.bf16.gmra.mrb[0].mxu0 %v561
      %v740 = vpop.f32.mrb[0].mxu0
      %v741 = vadd.f32 0.0, %v740
      %v742 = vpop.f32.mrb[0].mxu0
      %v743 = vadd.f32 0.0, %v742
      %v744 = vpop.f32.mrb[0].mxu0
      %v745 = vadd.f32 0.0, %v744
      %v746 = vpop.f32.mrb[0].mxu0
      %v747 = vadd.f32 0.0, %v746
      %748 = vmatprep.mubr.bf16.mxu0 0
      %749 = vmatmul.mubr.bf16.gmra.mrb[0].mxu0 %v564
      %v750 = vpop.f32.mrb[0].mxu0
      %v751 = vadd.f32 0.0, %v750
      %v752 = vpop.f32.mrb[0].mxu0
      %v753 = vadd.f32 0.0, %v752
      %v754 = vpop.f32.mrb[0].mxu0
      %v755 = vadd.f32 0.0, %v754
      %v756 = vpop.f32.mrb[0].mxu0
      %v757 = vadd.f32 0.0, %v756
      %758 = vdwg.mxu0
      %v759 = vadd.f32 %v293, %v601
      %v760 = vadd.f32 %v294, %v603
      %v761 = vadd.f32 %v295, %v605
      %v762 = vadd.f32 %v296, %v607
      %v763 = vadd.f32 %v297, %v611
      %v764 = vadd.f32 %v298, %v613
      %v765 = vadd.f32 %v299, %v615
      %v766 = vadd.f32 %v300, %v617
      %v767 = vadd.f32 %v301, %v621
      %v768 = vadd.f32 %v302, %v623
      %v769 = vadd.f32 %v303, %v625
      %v770 = vadd.f32 %v304, %v627
      %v771 = vadd.f32 %v305, %v631
      %v772 = vadd.f32 %v306, %v633
      %v773 = vadd.f32 %v307, %v635
      %v774 = vadd.f32 %v308, %v637
      %v775 = vadd.f32 %v309, %v641
      %v776 = vadd.f32 %v310, %v643
      %v777 = vadd.f32 %v311, %v645
      %v778 = vadd.f32 %v312, %v647
      %v779 = vadd.f32 %v313, %v651
      %v780 = vadd.f32 %v314, %v653
      %v781 = vadd.f32 %v315, %v655
      %v782 = vadd.f32 %v316, %v657
      %v783 = vadd.f32 %v317, %v661
      %v784 = vadd.f32 %v318, %v663
      %v785 = vadd.f32 %v319, %v665
      %v786 = vadd.f32 %v320, %v667
      %v787 = vadd.f32 %v321, %v671
      %v788 = vadd.f32 %v322, %v673
      %v789 = vadd.f32 %v323, %v675
      %v790 = vadd.f32 %v324, %v677
      %v791 = vadd.f32 %v325, %v681
      %v792 = vadd.f32 %v326, %v683
      %v793 = vadd.f32 %v327, %v685
      %v794 = vadd.f32 %v328, %v687
      %v795 = vadd.f32 %v329, %v691
      %v796 = vadd.f32 %v330, %v693
      %v797 = vadd.f32 %v331, %v695
      %v798 = vadd.f32 %v332, %v697
      %v799 = vadd.f32 %v333, %v701
      %v800 = vadd.f32 %v334, %v703
      %v801 = vadd.f32 %v335, %v705
      %v802 = vadd.f32 %v336, %v707
      %v803 = vadd.f32 %v337, %v711
      %v804 = vadd.f32 %v338, %v713
      %v805 = vadd.f32 %v339, %v715
      %v806 = vadd.f32 %v340, %v717
      %v807 = vadd.f32 %v341, %v721
      %v808 = vadd.f32 %v342, %v723
      %v809 = vadd.f32 %v343, %v725
      %v810 = vadd.f32 %v344, %v727
      %v811 = vadd.f32 %v345, %v731
      %v812 = vadd.f32 %v346, %v733
      %v813 = vadd.f32 %v347, %v735
      %v814 = vadd.f32 %v348, %v737
      %v815 = vadd.f32 %v349, %v741
      %v816 = vadd.f32 %v350, %v743
      %v817 = vadd.f32 %v351, %v745
      %v818 = vadd.f32 %v352, %v747
      %v819 = vadd.f32 %v353, %v751
      %v820 = vadd.f32 %v354, %v753
      %v821 = vadd.f32 %v355, %v755
      %v822 = vadd.f32 %v356, %v757
      %823 = vst [vmem:[#allocation2] sm:$0xff] %v759
      %824 = vst [vmem:[#allocation2 + $0x8] sm:$0xff] %v760
      %825 = vst [vmem:[#allocation2 + $0x10] sm:$0xff] %v761
      %826 = vst [vmem:[#allocation2 + $0x18] sm:$0xff] %v762
      %827 = vst [vmem:[#allocation2 + $0x20] sm:$0xff] %v763
      %828 = vst [vmem:[#allocation2 + $0x28] sm:$0xff] %v764
      %829 = vst [vmem:[#allocation2 + $0x30] sm:$0xff] %v765
      %830 = vst [vmem:[#allocation2 + $0x38] sm:$0xff] %v766
      %831 = vst [vmem:[#allocation2 + $0x40] sm:$0xff] %v767
      %832 = vst [vmem:[#allocation2 + $0x48] sm:$0xff] %v768
      %833 = vst [vmem:[#allocation2 + $0x50] sm:$0xff] %v769
      %834 = vst [vmem:[#allocation2 + $0x58] sm:$0xff] %v770
      %835 = vst [vmem:[#allocation2 + $0x60] sm:$0xff] %v771
      %836 = vst [vmem:[#allocation2 + $0x68] sm:$0xff] %v772
      %837 = vst [vmem:[#allocation2 + $0x70] sm:$0xff] %v773
      %838 = vst [vmem:[#allocation2 + $0x78] sm:$0xff] %v774
      %839 = vst [vmem:[#allocation2 + $0x80] sm:$0xff] %v775
      %840 = vst [vmem:[#allocation2 + $0x88] sm:$0xff] %v776
      %841 = vst [vmem:[#allocation2 + $0x90] sm:$0xff] %v777
      %842 = vst [vmem:[#allocation2 + $0x98] sm:$0xff] %v778
      %843 = vst [vmem:[#allocation2 + $0xa0] sm:$0xff] %v779
      %844 = vst [vmem:[#allocation2 + $0xa8] sm:$0xff] %v780
      %845 = vst [vmem:[#allocation2 + $0xb0] sm:$0xff] %v781
      %846 = vst [vmem:[#allocation2 + $0xb8] sm:$0xff] %v782
      %847 = vst [vmem:[#allocation2 + $0xc0] sm:$0xff] %v783
      %848 = vst [vmem:[#allocation2 + $0xc8] sm:$0xff] %v784
      %849 = vst [vmem:[#allocation2 + $0xd0] sm:$0xff] %v785
      %850 = vst [vmem:[#allocation2 + $0xd8] sm:$0xff] %v786
      %851 = vst [vmem:[#allocation2 + $0xe0] sm:$0xff] %v787
      %852 = vst [vmem:[#allocation2 + $0xe8] sm:$0xff] %v788
      %853 = vst [vmem:[#allocation2 + $0xf0] sm:$0xff] %v789
      %854 = vst [vmem:[#allocation2 + $0xf8] sm:$0xff] %v790
      %855 = vst [vmem:[#allocation2 + $0x100] sm:$0xff] %v791
      %856 = vst [vmem:[#allocation2 + $0x108] sm:$0xff] %v792
      %857 = vst [vmem:[#allocation2 + $0x110] sm:$0xff] %v793
      %858 = vst [vmem:[#allocation2 + $0x118] sm:$0xff] %v794
      %859 = vst [vmem:[#allocation2 + $0x120] sm:$0xff] %v795
      %860 = vst [vmem:[#allocation2 + $0x128] sm:$0xff] %v796
      %861 = vst [vmem:[#allocation2 + $0x130] sm:$0xff] %v797
      %862 = vst [vmem:[#allocation2 + $0x138] sm:$0xff] %v798
      %863 = vst [vmem:[#allocation2 + $0x140] sm:$0xff] %v799
      %864 = vst [vmem:[#allocation2 + $0x148] sm:$0xff] %v800
      %865 = vst [vmem:[#allocation2 + $0x150] sm:$0xff] %v801
      %866 = vst [vmem:[#allocation2 + $0x158] sm:$0xff] %v802
      %867 = vst [vmem:[#allocation2 + $0x160] sm:$0xff] %v803
      %868 = vst [vmem:[#allocation2 + $0x168] sm:$0xff] %v804
      %869 = vst [vmem:[#allocation2 + $0x170] sm:$0xff] %v805
      %870 = vst [vmem:[#allocation2 + $0x178] sm:$0xff] %v806
      %871 = vst [vmem:[#allocation2 + $0x180] sm:$0xff] %v807
      %872 = vst [vmem:[#allocation2 + $0x188] sm:$0xff] %v808
      %873 = vst [vmem:[#allocation2 + $0x190] sm:$0xff] %v809
      %874 = vst [vmem:[#allocation2 + $0x198] sm:$0xff] %v810
      %875 = vst [vmem:[#allocation2 + $0x1a0] sm:$0xff] %v811
      %876 = vst [vmem:[#allocation2 + $0x1a8] sm:$0xff] %v812
      %877 = vst [vmem:[#allocation2 + $0x1b0] sm:$0xff] %v813
      %878 = vst [vmem:[#allocation2 + $0x1b8] sm:$0xff] %v814
      %879 = vst [vmem:[#allocation2 + $0x1c0] sm:$0xff] %v815
      %880 = vst [vmem:[#allocation2 + $0x1c8] sm:$0xff] %v816
      %881 = vst [vmem:[#allocation2 + $0x1d0] sm:$0xff] %v817
      %882 = vst [vmem:[#allocation2 + $0x1d8] sm:$0xff] %v818
      %883 = vst [vmem:[#allocation2 + $0x1e0] sm:$0xff] %v819
      %884 = vst [vmem:[#allocation2 + $0x1e8] sm:$0xff] %v820
      %885 = vst [vmem:[#allocation2 + $0x1f0] sm:$0xff] %v821
      %886 = vst [vmem:[#allocation2 + $0x1f8] sm:$0xff] %v822
      // Predicated region
      $region37: #{a_call__.6} parent=31 // pred_check
        %p887 = pneg %p225
      $region38: #{a_call__.6} parent=31 // pred_check_branch
        %889 = sbr.rel (%p887) target = $region40
      $region39: #{a_call__.6} parent=31 // pred_region
        %v890 = vld [vmem:[#allocation2] sm:$0xff]
        %v891 = vld [vmem:[#allocation2 + $0x8] sm:$0xff]
        %v892 = vld [vmem:[#allocation2 + $0x10] sm:$0xff]
        %v893 = vld [vmem:[#allocation2 + $0x18] sm:$0xff]
        %v894 = vld [vmem:[#allocation2 + $0x20] sm:$0xff]
        %v895 = vld [vmem:[#allocation2 + $0x28] sm:$0xff]
        %v896 = vld [vmem:[#allocation2 + $0x30] sm:$0xff]
        %v897 = vld [vmem:[#allocation2 + $0x38] sm:$0xff]
        %v898 = vld [vmem:[#allocation2 + $0x40] sm:$0xff]
        %v899 = vld [vmem:[#allocation2 + $0x48] sm:$0xff]
        %v900 = vld [vmem:[#allocation2 + $0x50] sm:$0xff]
        %v901 = vld [vmem:[#allocation2 + $0x58] sm:$0xff]
        %v902 = vld [vmem:[#allocation2 + $0x60] sm:$0xff]
        %v903 = vld [vmem:[#allocation2 + $0x68] sm:$0xff]
        %v904 = vld [vmem:[#allocation2 + $0x70] sm:$0xff]
        %v905 = vld [vmem:[#allocation2 + $0x78] sm:$0xff]
        %v906 = vld [vmem:[#allocation2 + $0x80] sm:$0xff]
        %v907 = vld [vmem:[#allocation2 + $0x88] sm:$0xff]
        %v908 = vld [vmem:[#allocation2 + $0x90] sm:$0xff]
        %v909 = vld [vmem:[#allocation2 + $0x98] sm:$0xff]
        %v910 = vld [vmem:[#allocation2 + $0xa0] sm:$0xff]
        %v911 = vld [vmem:[#allocation2 + $0xa8] sm:$0xff]
        %v912 = vld [vmem:[#allocation2 + $0xb0] sm:$0xff]
        %v913 = vld [vmem:[#allocation2 + $0xb8] sm:$0xff]
        %v914 = vld [vmem:[#allocation2 + $0xc0] sm:$0xff]
        %v915 = vld [vmem:[#allocation2 + $0xc8] sm:$0xff]
        %v916 = vld [vmem:[#allocation2 + $0xd0] sm:$0xff]
        %v917 = vld [vmem:[#allocation2 + $0xd8] sm:$0xff]
        %v918 = vld [vmem:[#allocation2 + $0xe0] sm:$0xff]
        %v919 = vld [vmem:[#allocation2 + $0xe8] sm:$0xff]
        %v920 = vld [vmem:[#allocation2 + $0xf0] sm:$0xff]
        %v921 = vld [vmem:[#allocation2 + $0xf8] sm:$0xff]
        %v922 = vld [vmem:[#allocation2 + $0x100] sm:$0xff]
        %v923 = vld [vmem:[#allocation2 + $0x108] sm:$0xff]
        %v924 = vld [vmem:[#allocation2 + $0x110] sm:$0xff]
        %v925 = vld [vmem:[#allocation2 + $0x118] sm:$0xff]
        %v926 = vld [vmem:[#allocation2 + $0x120] sm:$0xff]
        %v927 = vld [vmem:[#allocation2 + $0x128] sm:$0xff]
        %v928 = vld [vmem:[#allocation2 + $0x130] sm:$0xff]
        %v929 = vld [vmem:[#allocation2 + $0x138] sm:$0xff]
        %v930 = vld [vmem:[#allocation2 + $0x140] sm:$0xff]
        %v931 = vld [vmem:[#allocation2 + $0x148] sm:$0xff]
        %v932 = vld [vmem:[#allocation2 + $0x150] sm:$0xff]
        %v933 = vld [vmem:[#allocation2 + $0x158] sm:$0xff]
        %v934 = vld [vmem:[#allocation2 + $0x160] sm:$0xff]
        %v935 = vld [vmem:[#allocation2 + $0x168] sm:$0xff]
        %v936 = vld [vmem:[#allocation2 + $0x170] sm:$0xff]
        %v937 = vld [vmem:[#allocation2 + $0x178] sm:$0xff]
        %v938 = vld [vmem:[#allocation2 + $0x180] sm:$0xff]
        %v939 = vld [vmem:[#allocation2 + $0x188] sm:$0xff]
        %v940 = vld [vmem:[#allocation2 + $0x190] sm:$0xff]
        %v941 = vld [vmem:[#allocation2 + $0x198] sm:$0xff]
        %v942 = vld [vmem:[#allocation2 + $0x1a0] sm:$0xff]
        %v943 = vld [vmem:[#allocation2 + $0x1a8] sm:$0xff]
        %v944 = vld [vmem:[#allocation2 + $0x1b0] sm:$0xff]
        %v945 = vld [vmem:[#allocation2 + $0x1b8] sm:$0xff]
        %v946 = vld [vmem:[#allocation2 + $0x1c0] sm:$0xff]
        %v947 = vld [vmem:[#allocation2 + $0x1c8] sm:$0xff]
        %v948 = vld [vmem:[#allocation2 + $0x1d0] sm:$0xff]
        %v949 = vld [vmem:[#allocation2 + $0x1d8] sm:$0xff]
        %v950 = vld [vmem:[#allocation2 + $0x1e0] sm:$0xff]
        %v951 = vld [vmem:[#allocation2 + $0x1e8] sm:$0xff]
        %v952 = vld [vmem:[#allocation2 + $0x1f0] sm:$0xff]
        %v953 = vld [vmem:[#allocation2 + $0x1f8] sm:$0xff]
        %v954 = vld [vmem:[%s2] sm:$0x3]
        %v956 = vlaneseq
        %v957 = vshrl.u32 %v956, 7
        %v958 = vsub.s32 0, %v957
        %v959 = vrot.slane %v954, %v958
        %v960 = vlaneseq
        %v961 = vshrl.u32 %v960, 7
        %v962 = vsub.s32 1, %v961
        %v963 = vrot.slane %v954, %v962
        %v966 = vadd.f32 %v890, %v959
        %v967 = vadd.f32 %v891, %v963
        %v968 = vadd.f32 %v892, %v959
        %v969 = vadd.f32 %v893, %v963
        %v970 = vadd.f32 %v894, %v959
        %v971 = vadd.f32 %v895, %v963
        %v972 = vadd.f32 %v896, %v959
        %v973 = vadd.f32 %v897, %v963
        %v974 = vadd.f32 %v898, %v959
        %v975 = vadd.f32 %v899, %v963
        %v976 = vadd.f32 %v900, %v959
        %v977 = vadd.f32 %v901, %v963
        %v978 = vadd.f32 %v902, %v959
        %v979 = vadd.f32 %v903, %v963
        %v980 = vadd.f32 %v904, %v959
        %v981 = vadd.f32 %v905, %v963
        %v982 = vadd.f32 %v906, %v959
        %v983 = vadd.f32 %v907, %v963
        %v984 = vadd.f32 %v908, %v959
        %v985 = vadd.f32 %v909, %v963
        %v986 = vadd.f32 %v910, %v959
        %v987 = vadd.f32 %v911, %v963
        %v988 = vadd.f32 %v912, %v959
        %v989 = vadd.f32 %v913, %v963
        %v990 = vadd.f32 %v914, %v959
        %v991 = vadd.f32 %v915, %v963
        %v992 = vadd.f32 %v916, %v959
        %v993 = vadd.f32 %v917, %v963
        %v994 = vadd.f32 %v918, %v959
        %v995 = vadd.f32 %v919, %v963
        %v996 = vadd.f32 %v920, %v959
        %v997 = vadd.f32 %v921, %v963
        %v998 = vadd.f32 %v922, %v959
        %v999 = vadd.f32 %v923, %v963
        %v1000 = vadd.f32 %v924, %v959
        %v1001 = vadd.f32 %v925, %v963
        %v1002 = vadd.f32 %v926, %v959
        %v1003 = vadd.f32 %v927, %v963
        %v1004 = vadd.f32 %v928, %v959
        %v1005 = vadd.f32 %v929, %v963
        %v1006 = vadd.f32 %v930, %v959
        %v1007 = vadd.f32 %v931, %v963
        %v1008 = vadd.f32 %v932, %v959
        %v1009 = vadd.f32 %v933, %v963
        %v1010 = vadd.f32 %v934, %v959
        %v1011 = vadd.f32 %v935, %v963
        %v1012 = vadd.f32 %v936, %v959
        %v1013 = vadd.f32 %v937, %v963
        %v1014 = vadd.f32 %v938, %v959
        %v1015 = vadd.f32 %v939, %v963
        %v1016 = vadd.f32 %v940, %v959
        %v1017 = vadd.f32 %v941, %v963
        %v1018 = vadd.f32 %v942, %v959
        %v1019 = vadd.f32 %v943, %v963
        %v1020 = vadd.f32 %v944, %v959
        %v1021 = vadd.f32 %v945, %v963
        %v1022 = vadd.f32 %v946, %v959
        %v1023 = vadd.f32 %v947, %v963
        %v1024 = vadd.f32 %v948, %v959
        %v1025 = vadd.f32 %v949, %v963
        %v1026 = vadd.f32 %v950, %v959
        %v1027 = vadd.f32 %v951, %v963
        %v1028 = vadd.f32 %v952, %v959
        %v1029 = vadd.f32 %v953, %v963
        %1030 = vst [vmem:[%s222] sm:$0xff] %v966
        %1031 = vst [vmem:[%s222 + $0x8] sm:$0xff] %v967
        %1032 = vst [vmem:[%s222 + $0x10] sm:$0xff] %v968
        %1033 = vst [vmem:[%s222 + $0x18] sm:$0xff] %v969
        %1034 = vst [vmem:[%s222 + $0x20] sm:$0xff] %v970
        %1035 = vst [vmem:[%s222 + $0x28] sm:$0xff] %v971
        %1036 = vst [vmem:[%s222 + $0x30] sm:$0xff] %v972
        %1037 = vst [vmem:[%s222 + $0x38] sm:$0xff] %v973
        %1038 = vst [vmem:[%s222 + $0x40] sm:$0xff] %v974
        %1039 = vst [vmem:[%s222 + $0x48] sm:$0xff] %v975
        %1040 = vst [vmem:[%s222 + $0x50] sm:$0xff] %v976
        %1041 = vst [vmem:[%s222 + $0x58] sm:$0xff] %v977
        %1042 = vst [vmem:[%s222 + $0x60] sm:$0xff] %v978
        %1043 = vst [vmem:[%s222 + $0x68] sm:$0xff] %v979
        %1044 = vst [vmem:[%s222 + $0x70] sm:$0xff] %v980
        %1045 = vst [vmem:[%s222 + $0x78] sm:$0xff] %v981
        %1046 = vst [vmem:[%s222 + $0x80] sm:$0xff] %v982
        %1047 = vst [vmem:[%s222 + $0x88] sm:$0xff] %v983
        %1048 = vst [vmem:[%s222 + $0x90] sm:$0xff] %v984
        %1049 = vst [vmem:[%s222 + $0x98] sm:$0xff] %v985
        %1050 = vst [vmem:[%s222 + $0xa0] sm:$0xff] %v986
        %1051 = vst [vmem:[%s222 + $0xa8] sm:$0xff] %v987
        %1052 = vst [vmem:[%s222 + $0xb0] sm:$0xff] %v988
        %1053 = vst [vmem:[%s222 + $0xb8] sm:$0xff] %v989
        %1054 = vst [vmem:[%s222 + $0xc0] sm:$0xff] %v990
        %1055 = vst [vmem:[%s222 + $0xc8] sm:$0xff] %v991
        %1056 = vst [vmem:[%s222 + $0xd0] sm:$0xff] %v992
        %1057 = vst [vmem:[%s222 + $0xd8] sm:$0xff] %v993
        %1058 = vst [vmem:[%s222 + $0xe0] sm:$0xff] %v994
        %1059 = vst [vmem:[%s222 + $0xe8] sm:$0xff] %v995
        %1060 = vst [vmem:[%s222 + $0xf0] sm:$0xff] %v996
        %1061 = vst [vmem:[%s222 + $0xf8] sm:$0xff] %v997
        %1062 = vst [vmem:[%s222 + $0x100] sm:$0xff] %v998
        %1063 = vst [vmem:[%s222 + $0x108] sm:$0xff] %v999
        %1064 = vst [vmem:[%s222 + $0x110] sm:$0xff] %v1000
        %1065 = vst [vmem:[%s222 + $0x118] sm:$0xff] %v1001
        %1066 = vst [vmem:[%s222 + $0x120] sm:$0xff] %v1002
        %1067 = vst [vmem:[%s222 + $0x128] sm:$0xff] %v1003
        %1068 = vst [vmem:[%s222 + $0x130] sm:$0xff] %v1004
        %1069 = vst [vmem:[%s222 + $0x138] sm:$0xff] %v1005
        %1070 = vst [vmem:[%s222 + $0x140] sm:$0xff] %v1006
        %1071 = vst [vmem:[%s222 + $0x148] sm:$0xff] %v1007
        %1072 = vst [vmem:[%s222 + $0x150] sm:$0xff] %v1008
        %1073 = vst [vmem:[%s222 + $0x158] sm:$0xff] %v1009
        %1074 = vst [vmem:[%s222 + $0x160] sm:$0xff] %v1010
        %1075 = vst [vmem:[%s222 + $0x168] sm:$0xff] %v1011
        %1076 = vst [vmem:[%s222 + $0x170] sm:$0xff] %v1012
        %1077 = vst [vmem:[%s222 + $0x178] sm:$0xff] %v1013
        %1078 = vst [vmem:[%s222 + $0x180] sm:$0xff] %v1014
        %1079 = vst [vmem:[%s222 + $0x188] sm:$0xff] %v1015
        %1080 = vst [vmem:[%s222 + $0x190] sm:$0xff] %v1016
        %1081 = vst [vmem:[%s222 + $0x198] sm:$0xff] %v1017
        %1082 = vst [vmem:[%s222 + $0x1a0] sm:$0xff] %v1018
        %1083 = vst [vmem:[%s222 + $0x1a8] sm:$0xff] %v1019
        %1084 = vst [vmem:[%s222 + $0x1b0] sm:$0xff] %v1020
        %1085 = vst [vmem:[%s222 + $0x1b8] sm:$0xff] %v1021
        %1086 = vst [vmem:[%s222 + $0x1c0] sm:$0xff] %v1022
        %1087 = vst [vmem:[%s222 + $0x1c8] sm:$0xff] %v1023
        %1088 = vst [vmem:[%s222 + $0x1d0] sm:$0xff] %v1024
        %1089 = vst [vmem:[%s222 + $0x1d8] sm:$0xff] %v1025
        %1090 = vst [vmem:[%s222 + $0x1e0] sm:$0xff] %v1026
        %1091 = vst [vmem:[%s222 + $0x1e8] sm:$0xff] %v1027
        %1092 = vst [vmem:[%s222 + $0x1f0] sm:$0xff] %v1028
        %1093 = vst [vmem:[%s222 + $0x1f8] sm:$0xff] %v1029
      $region40: #{a_call__.6} parent=31 // pred_fallthru
        _
      %s1094 = smul.u32 32, %s18
      %p1095 = scmp.lt.s32.totalorder %s1094, 63
      %s1096 = scalar_select %p1095, %s1094, 63
      %s1097 = smul.addr %s1096, 2
      %s1098 = smul.addr %s1097, 8
      %s1099 = scalar_lea.vmem %s3, %s1098
      // Predicated region
      $region41: #{a_call__.6} parent=31 // pred_check
        %p1100 = pneg %p119
      $region42: #{a_call__.6} parent=31 // pred_check_branch
        %1102 = sbr.rel (%p1100) target = $region44
      $region43: #{a_call__.6} parent=31 // pred_region
        %s1103 = smul.u32 32, %s18
      $region44: #{a_call__.6} parent=31 // pred_fallthru
        _
    $region32: #{a_call__.6} parent=5 // pred_fallthru
      _
    %p1104 = scmp.le.s32.totalorder 2, %s9
    // Predicated region
    $region45: #{a_call__.6} parent=5 // pred_check
      %p1105 = pneg %p1104
    $region46: #{a_call__.6} parent=5 // pred_check_branch
      %1107 = sbr.rel (%p1105) target = $region48
    $region47: #{a_call__.6} parent=5 // pred_region
      %s1108 = ssub.s32 %s9, 2
      // Predicated region
      $region49: #{a_call__.6} parent=47 // pred_check
        %p1109 = pneg %p125
      $region50: #{a_call__.6} parent=47 // pred_check_branch
        %1111 = sbr.rel (%p1109) target = $region52
      $region51: #{a_call__.6} parent=47 // pred_region
        %s1112 = smul.u32 32, %s20
        %p1113 = scmp.lt.s32.totalorder %s1112, 63
        %s1114 = scalar_select %p1113, %s1112, 63
        %s1115 = smul.addr %s1114, 2
        %s1116 = smul.addr %s1115, 8
        %s1117 = scalar_lea.vmem %s3, %s1116
      $region52: #{a_call__.6} parent=47 // pred_fallthru
        _
    $region48: #{a_call__.6} parent=5 // pred_fallthru
      _
  $region6: #{a_call__.6} parent=0 // loop_footer
    %s13 = sadd.s32 1, %s9
  $region7: #{a_call__.6} parent=0 // loop_footer_branch
    %8 = sbr.rel target = $region3
  $region8: #{a_call__.6} parent=0 // loop_exit
    _

</llo_original>
